<compile_context>
chip_gen: v5e
topology: v5e:2x2
jax: 0.10.0
libtpu: 0.0.40
codegen_flags: <defaults>
</compile_context>

<pallas_src>
import functools

import jax
import jax.numpy as jnp
from jax.experimental import pallas as pl
from jax.experimental.pallas import tpu as pltpu


def _round_up(v, m):
    return ((v + m - 1) // m) * m


def _choose_tile_m(M, cap):
    """Pick tile_m that (a) divides M exactly when possible (no padding, no
    post-kernel slice), (b) is a multiple of 16 (bf16 sublane packing), and
    (c) yields >= 2 grid blocks when possible (v7x megacore)."""
    top = min(cap, M)
    exact = [t for t in range(16, top + 1, 16) if M % t == 0]
    if exact:
        multi = [t for t in exact if M // t >= 2]
        tile = max(multi) if multi else max(exact)
        return tile, M
    # No multiple-of-16 divisor <= cap: pad M minimally and slice afterwards.
    cands = [t for t in (512, 384, 256, 128, 64, 32, 16) if t <= cap] or [16]
    tile = min(cands, key=lambda t: (_round_up(M, t) - M, -t))
    return tile, _round_up(M, tile)


def _patch_embed_kernel(x_ref, w_ref, b_ref, o_ref):
    # (tile_m, Kp) bf16 @ (Kp, N) bf16 on the MXU with f32 accumulation;
    # bias add is a free VPU epilogue alongside the MXU work.
    acc = jnp.dot(x_ref[...], w_ref[...], preferred_element_type=jnp.float32)
    o_ref[...] = (acc + b_ref[...]).astype(o_ref.dtype)


@functools.partial(
    jax.jit, static_argnames=("patch_size", "tile_m_cap", "out_dtype"))
def patch_embed_forward(x, conv_w, conv_b, *, patch_size,
                        tile_m_cap=512, out_dtype=jnp.bfloat16):
    """x: (B, C, H, W) f32 NCHW; conv_w: (E, C, ph, pw); conv_b: (E,)."""
    B, C, H, W = x.shape
    E = conv_w.shape[0]
    ph = pw = patch_size
    assert H % ph == 0 and W % pw == 0, (
        "input spatial size must be divisible by patch_size")
    Ho, Wo = H // ph, W // pw
    num_patches = Ho * Wo

    # --- glue: non-overlapping patch extraction (reshape/transpose only) ---
    # (B, C, Ho, ph, Wo, pw) -> (B, Ho, Wo, C, ph, pw) -> (B*Ho*Wo, C*ph*pw).
    # allow_input_fusion below lets XLA fold this (plus pad/cast) into the
    # pallas_call input DMA instead of materializing the slab in HBM.
    patches = x.reshape(B, C, Ho, ph, Wo, pw).transpose(0, 2, 4, 1, 3, 5)
    patches = patches.reshape(B * num_patches, C * ph * pw)

    # Conv weight (E, C, ph, pw) -> (C*ph*pw, E), rows matching patch layout.
    w2d = conv_w.reshape(E, C * ph * pw).T

    M, K = patches.shape
    N = E                                # NOT padded: exact-fit output
    Kp = _round_up(K, 128)               # full-width aligned MXU passes
    tile_m, Mp = _choose_tile_m(M, tile_m_cap)

    # bf16 inputs for the MXU (f32 accumulation inside the kernel).
    patches_p = patches.astype(jnp.bfloat16)
    if Mp != M or Kp != K:
        patches_p = jnp.pad(patches_p, ((0, Mp - M), (0, Kp - K)))
    w_p = w2d.astype(jnp.bfloat16)
    if Kp != K:
        w_p = jnp.pad(w_p, ((0, Kp - K), (0, 0)))
    b_p = conv_b.astype(jnp.float32).reshape(1, N)

    grid = (Mp // tile_m,)               # 1-D grid: weight/bias stay resident

    out_bytes = jnp.dtype(out_dtype).itemsize
    cost = pl.CostEstimate(
        flops=2 * Mp * Kp * N,
        transcendentals=0,
        bytes_accessed=Mp * Kp * 2 + Kp * N * 2 + N * 4 + Mp * N * out_bytes,
    )

    out_p = pl.pallas_call(
        _patch_embed_kernel,
        out_shape=jax.ShapeDtypeStruct((Mp, N), out_dtype),
        grid=grid,
        in_specs=[
            pl.BlockSpec((tile_m, Kp), lambda i: (i, 0)),   # patches (streamed)
            pl.BlockSpec((Kp, N), lambda i: (0, 0)),        # weight (resident)
            pl.BlockSpec((1, N), lambda i: (0, 0)),         # bias (resident)
        ],
        out_specs=pl.BlockSpec((tile_m, N), lambda i: (i, 0)),
        compiler_params=pltpu.CompilerParams(
            dimension_semantics=("parallel",),
            allow_input_fusion=[True, True, True],
        ),
        cost_estimate=cost,
    )(patches_p, w_p, b_p)

    out = out_p if Mp == M else out_p[:M]     # no-op slice in the common case
    # -> (B, num_patches, embed_dim), matching .flatten(2).transpose(1, 2).
    # norm_layer is None -> identity.
    return out.reshape(B, num_patches, E)


if __name__ == "__main__":
    # Small, module-consistent shapes: in_chans hard-coded to 12 in the
    # module's Conv2d, patch_size=4; pick img_size=16, embed_dim=32, batch=2.
    B, C, H, W = 2, 12, 16, 16
    patch = 4
    embed_dim = 32

    key = jax.random.PRNGKey(0)
    kx, kw, kb = jax.random.split(key, 3)

    x = jax.random.normal(kx, (B, C, H, W), dtype=jnp.float32)
    # Deterministic synthetic parameters (Conv2d weight/bias shapes).
    conv_w = jax.random.normal(
        kw, (embed_dim, C, patch, patch), dtype=jnp.float32) * 0.02
    conv_b = jax.random.normal(kb, (embed_dim,), dtype=jnp.float32) * 0.02

    out = patch_embed_forward(x, conv_w, conv_b, patch_size=patch)
    out = jax.block_until_ready(out)

    # Pure-JAX f32 reference (patch extraction + einsum), mirroring
    # Conv2d(stride=kernel) + flatten(2).transpose(1, 2).
    Ho, Wo = H // patch, W // patch
    ref_patches = x.reshape(B, C, Ho, patch, Wo, patch).transpose(
        0, 2, 4, 1, 3, 5).reshape(B, Ho * Wo, C * patch * patch)
    ref = jnp.einsum("bpk,ek->bpe", ref_patches,
                     conv_w.reshape(embed_dim, -1)) + conv_b

    assert out.shape == (B, Ho * Wo, embed_dim)
    # bf16 inputs + bf16 output (f32 accumulation) -> looser tolerance vs.
    # the pure-f32 reference.
    out_f32 = out.astype(jnp.float32)
    err = float(jnp.max(jnp.abs(out_f32 - ref)))
    assert jnp.allclose(out_f32, ref, atol=3e-2, rtol=3e-2), err

    print("KERNEL_OK")
</pallas_src>

<mosaic_0001>
module attributes {stable_mosaic.version = 11 : i64} {
  func.func @_patch_embed_kernel(%arg0: i32, %arg1: memref<16x256xbf16, #tpu.memory_space<vmem>>, %arg2: memref<256x32xbf16, #tpu.memory_space<vmem>>, %arg3: memref<1x32xf32, #tpu.memory_space<vmem>>, %arg4: memref<16x32xbf16, #tpu.memory_space<vmem>>) attributes {dimension_semantics = [#tpu.dimension_semantics<parallel>], iteration_bounds = array<i64: 2>, scalar_prefetch = 0 : i64, scratch_operands = 0 : i64, tpu.core_type = #tpu.core_type<tc>, window_params = [{transform_indices = @transform_0, window_bounds = array<i64: 16, 256>}, {pipeline_mode = #tpu.pipeline_mode<synchronous>, transform_indices = @transform_1, window_bounds = array<i64: 256, 32>}, {pipeline_mode = #tpu.pipeline_mode<synchronous>, transform_indices = @transform_2, window_bounds = array<i64: 1, 32>}, {transform_indices = @transform_3, window_bounds = array<i64: 16, 32>}]} {
    %c0 = arith.constant 0 : index
    %c0_0 = arith.constant 0 : index
    %0 = vector.load %arg1[%c0, %c0_0] : memref<16x256xbf16, #tpu.memory_space<vmem>>, vector<16x256xbf16>
    %c0_1 = arith.constant 0 : index
    %c0_2 = arith.constant 0 : index
    %1 = vector.load %arg2[%c0_1, %c0_2] : memref<256x32xbf16, #tpu.memory_space<vmem>>, vector<256x32xbf16>
    %cst = arith.constant dense<0.000000e+00> : vector<16x32xf32>
    %2 = tpu.matmul %0, %1, %cst {dimension_numbers = #tpu.dot_dimension_numbers<[1], [0], [0], [1], [0, 0, 1, 1], [], []>} : vector<16x256xbf16>, vector<256x32xbf16>, vector<16x32xf32> -> vector<16x32xf32>
    %c0_3 = arith.constant 0 : index
    %c0_4 = arith.constant 0 : index
    %3 = vector.load %arg3[%c0_3, %c0_4] : memref<1x32xf32, #tpu.memory_space<vmem>>, vector<1x32xf32>
    %4 = vector.broadcast %3 : vector<1x32xf32> to vector<16x32xf32>
    %5 = arith.addf %2, %4 : vector<16x32xf32>
    %6 = arith.truncf %5 : vector<16x32xf32> to vector<16x32xbf16>
    %c0_5 = arith.constant 0 : index
    %c0_6 = arith.constant 0 : index
    %7 = vector.load %arg4[%c0_5, %c0_6] : memref<16x32xbf16, #tpu.memory_space<vmem>>, vector<16x32xbf16>
    tpu.vector_store %arg4[%c0_5, %c0_6], %6 {strides = array<i32>} : memref<16x32xbf16, #tpu.memory_space<vmem>>, vector<16x32xbf16>,
    return
  }
  func.func @transform_0(%arg0: i32) -> (i32, i32) {
    %c0_i32 = arith.constant 0 : i32
    %c0_i32_0 = arith.constant 0 : i32
    return %arg0, %c0_i32 : i32, i32
  }
  func.func @transform_1(%arg0: i32) -> (i32, i32) {
    %c0_i32 = arith.constant 0 : i32
    %c0_i32_0 = arith.constant 0 : i32
    %c0_i32_1 = arith.constant 0 : i32
    return %c0_i32, %c0_i32_0 : i32, i32
  }
  func.func @transform_2(%arg0: i32) -> (i32, i32) {
    %c0_i32 = arith.constant 0 : i32
    %c0_i32_0 = arith.constant 0 : i32
    %c0_i32_1 = arith.constant 0 : i32
    return %c0_i32, %c0_i32_0 : i32, i32
  }
  func.func @transform_3(%arg0: i32) -> (i32, i32) {
    %c0_i32 = arith.constant 0 : i32
    %c0_i32_0 = arith.constant 0 : i32
    return %arg0, %c0_i32 : i32, i32
  }
}

</mosaic_0001>

<llo_original>
// kernel: patch_embed_forward.2
$region0: #{patch_embed_forward.2}
  #allocation0 [shape = 'u32[]', space=smem, size = 0x4, offset = 0x4, fixed_abs, tag = 'smem constant byte address 0x4 - core index']
  #allocation1 [shape = 'u32[72,128]{1,0:T(1,128)}', space=vmem, size = 0x9000, scoped, tag = 'internal scratch']
  #allocation2 [shape = 'u32[2048]{0}', space=vmem, size = 0x2000, scoped, tag = 'scoped memory for patch_embed_forward.2']
  #allocation3 [shape = 'u32[2048]{0}', space=vmem, size = 0x2000, scoped, tag = 'scoped memory for patch_embed_forward.2']
  #allocation4 [shape = 'u32[2048]{0}', space=vmem, size = 0x2000, scoped, tag = 'scoped memory for patch_embed_forward.2']
  #allocation5 [shape = 'u32[2048]{0}', space=vmem, size = 0x2000, scoped, tag = 'scoped memory for patch_embed_forward.2']
  #allocation6 [shape = 'u32[2048]{0}', space=vmem, size = 0x2000, scoped, tag = 'scoped memory for patch_embed_forward.2']
  #allocation7 [shape = 'u32[2048]{0}', space=vmem, size = 0x2000, scoped, tag = 'scoped memory for patch_embed_forward.2']
  #allocation8 [shape = 'u32[2048]{0}', space=vmem, size = 0x2000, scoped, tag = 'scoped memory for patch_embed_forward.2']
  #allocation9 [shape = 'u32[2048]{0}', space=vmem, size = 0x2000, scoped, tag = 'scoped memory for patch_embed_forward.2']
  #allocation10 [shape = 'u32[2048]{0}', space=vmem, size = 0x2000, scoped, tag = 'scoped memory for patch_embed_forward.2']
  #allocation11 [shape = 'u32[2048]{0}', space=vmem, size = 0x2000, scoped, tag = 'scoped memory for patch_embed_forward.2']
  %s0 = inlined_call_operand.vmem [shape: bf16[192,32], index: 0, kind: input, shape index: {}]
  %s1 = inlined_call_operand.<no memory space> [shape: bf16[], index: 1, kind: input, shape index: {}]
  %s2 = inlined_call_operand.vmem [shape: bf16[32,192], index: 2, kind: input, shape index: {}]
  %s3 = inlined_call_operand.vmem [shape: f32[32], index: 3, kind: input, shape index: {}]
  %s4 = inlined_call_operand.hbm [shape: bf16[32,32], index: 4, kind: output, shape index: {}]
  %s5 = sld [smem:[#allocation0]]
  $region45: #{patch_embed_forward.2} parent=0
    _
  %s7 = ssub.s32 1, %s5
  %s8 = scalar_select 0, %s7, %s5
  %v9 = vstv %s1
  %v10 = vunpack.i.l.bf16 %v9
  %v12 = vunpack.i.h.bf16 %v9
  %v14 = vstv %s1
  %v15 = vunpack.i.l.bf16 %v14
  %v17 = vunpack.i.h.bf16 %v14
  $region1: #{patch_embed_forward.2} parent=0
    #allocation12 [shape = 'u8[8192]{0}', space=vmem, size = 0x2000, scoped, tag = 'output window, operand 0']
    #allocation13 [shape = 's32[2]{0}', space=sflag, size = 0x8, scoped, tag = 'scoped memory for patch_embed_forward.2']
    %19 = vsyncpa [#allocation13], 0
    %s20 = scalar_lea.sflag [#allocation13], 1
    %21 = vsyncpa %s20, 0
    loop: start=0, step=1, limit=4
    $region2: #{patch_embed_forward.2} parent=1 // loop_pre_header
      _
    $region3: #{patch_embed_forward.2} parent=1 // loop_header
      %s23 = sphi 0, %s27
      %p24 = scmp.ge.s32.totalorder %s23, 4
      %s33 = sphi 0, %s35
      %s36 = sphi 0, %s33
      %s37 = sphi 0, %s36
      %s53 = sphi 0, %s37
      %s57 = sphi 0, %s57
      %s59 = sphi 0, %s57
      %s60 = sphi 0, %s59
      %s74 = sphi 0, %s60
      %s78 = sphi 0, %s78
      %s80 = sphi 0, %s78
      %s81 = sphi 0, %s80
      %s95 = sphi 0, %s81
      %s101 = sphi 0, %s103
      %s104 = sphi 0, %s101
      %s105 = sphi 0, %s104
      %s121 = sphi 0, %s105
    $region4: #{patch_embed_forward.2} parent=1 // loop_header_branch
      %26 = sbr.rel (%p24) target = $region8
    $region5: #{patch_embed_forward.2} parent=1 // loop_body
      %s28 = ssub.s32 %s23, 1
      %s29 = ssub.s32 %s23, 2
      %s30 = sadd.s32 %s23, 1
      %s31 = ssub.s32 %s23, %s30
      %p32 = scmp.eq.s32.totalorder %s31, 0
      %s34 = sadd.s32 %s33, 1
      %s35 = scalar_select %p32, %s33, %s34
      %p38 = pneg %p32
      %p39 = scmp.eq.s32.totalorder %s23, 1
      %p40 = por %p38, %p39
      %p41 = scmp.ne.s32.totalorder %s33, %s36
      %p42 = scmp.eq.s32.totalorder %s23, 0
      %p43 = por %p41, %p42
      %p44 = scmp.ne.s32.totalorder %s33, %s36
      %p45 = scmp.eq.s32.totalorder %s28, 1
      %p46 = por %p44, %p45
      %p47 = scmp.ne.s32.totalorder %s36, %s37
      %p48 = scmp.eq.s32.totalorder %s28, 0
      %p49 = por %p47, %p48
      %p50 = scmp.ne.s32.totalorder %s36, %s37
      %p51 = scmp.eq.s32.totalorder %s29, 1
      %p52 = por %p50, %p51
      %p54 = scmp.ne.s32.totalorder %s37, %s53
      %p55 = scmp.eq.s32.totalorder %s29, 0
      %p56 = por %p54, %p55
      %s58 = sadd.s32 %s57, 1
      %p61 = scmp.eq.s32.totalorder %s23, 1
      %p62 = scmp.ne.s32.totalorder %s57, %s59
      %p63 = scmp.eq.s32.totalorder %s23, 0
      %p64 = por %p62, %p63
      %p65 = scmp.ne.s32.totalorder %s57, %s59
      %p66 = scmp.eq.s32.totalorder %s28, 1
      %p67 = por %p65, %p66
      %p68 = scmp.ne.s32.totalorder %s59, %s60
      %p69 = scmp.eq.s32.totalorder %s28, 0
      %p70 = por %p68, %p69
      %p71 = scmp.ne.s32.totalorder %s59, %s60
      %p72 = scmp.eq.s32.totalorder %s29, 1
      %p73 = por %p71, %p72
      %p75 = scmp.ne.s32.totalorder %s60, %s74
      %p76 = scmp.eq.s32.totalorder %s29, 0
      %p77 = por %p75, %p76
      %s79 = sadd.s32 %s78, 1
      %p82 = scmp.eq.s32.totalorder %s23, 1
      %p83 = scmp.ne.s32.totalorder %s78, %s80
      %p84 = scmp.eq.s32.totalorder %s23, 0
      %p85 = por %p83, %p84
      %p86 = scmp.ne.s32.totalorder %s78, %s80
      %p87 = scmp.eq.s32.totalorder %s28, 1
      %p88 = por %p86, %p87
      %p89 = scmp.ne.s32.totalorder %s80, %s81
      %p90 = scmp.eq.s32.totalorder %s28, 0
      %p91 = por %p89, %p90
      %p92 = scmp.ne.s32.totalorder %s80, %s81
      %p93 = scmp.eq.s32.totalorder %s29, 1
      %p94 = por %p92, %p93
      %p96 = scmp.ne.s32.totalorder %s81, %s95
      %p97 = scmp.eq.s32.totalorder %s29, 0
      %p98 = por %p96, %p97
      %s99 = ssub.s32 %s23, %s30
      %p100 = scmp.eq.s32.totalorder %s99, 0
      %s102 = sadd.s32 %s101, 1
      %s103 = scalar_select %p100, %s101, %s102
      %p106 = pneg %p100
      %p107 = scmp.eq.s32.totalorder %s23, 1
      %p108 = por %p106, %p107
      %p109 = scmp.ne.s32.totalorder %s101, %s104
      %p110 = scmp.eq.s32.totalorder %s23, 0
      %p111 = por %p109, %p110
      %p112 = scmp.ne.s32.totalorder %s101, %s104
      %p113 = scmp.eq.s32.totalorder %s28, 1
      %p114 = por %p112, %p113
      %p115 = scmp.ne.s32.totalorder %s104, %s105
      %p116 = scmp.eq.s32.totalorder %s28, 0
      %p117 = por %p115, %p116
      %p118 = scmp.ne.s32.totalorder %s104, %s105
      %p119 = scmp.eq.s32.totalorder %s29, 1
      %p120 = por %p118, %p119
      %p122 = scmp.ne.s32.totalorder %s105, %s121
      %p123 = scmp.eq.s32.totalorder %s29, 0
      %p124 = por %p122, %p123
      %p125 = scmp.le.s32.totalorder 1, %s23
      %p126 = scmp.lt.s32.totalorder %s23, 3
      %p127 = pnand %p125, %p126
      %p128 = pneg %p127
      // Predicated region
      $region9: #{patch_embed_forward.2} parent=5 // pred_check
        _
      $region10: #{patch_embed_forward.2} parent=5 // pred_check_branch
        %130 = sbr.rel (%p127) target = $region12
      $region11: #{patch_embed_forward.2} parent=5 // pred_region
        %s131 = ssub.s32 %s23, 1
        // Predicated region
        $region13: #{patch_embed_forward.2} parent=11 // pred_check
          %p132 = pneg %p70
        $region14: #{patch_embed_forward.2} parent=11 // pred_check_branch
          %134 = sbr.rel (%p132) target = $region16
        $region15: #{patch_embed_forward.2} parent=11 // pred_region
          _
        $region16: #{patch_embed_forward.2} parent=11 // pred_fallthru
          _
        // Predicated region
        $region17: #{patch_embed_forward.2} parent=11 // pred_check
          %p135 = pneg %p91
        $region18: #{patch_embed_forward.2} parent=11 // pred_check_branch
          %137 = sbr.rel (%p135) target = $region20
        $region19: #{patch_embed_forward.2} parent=11 // pred_region
          _
        $region20: #{patch_embed_forward.2} parent=11 // pred_fallthru
          _
      $region12: #{patch_embed_forward.2} parent=5 // pred_fallthru
        _
      %p138 = scmp.lt.s32.totalorder %s23, 2
      // Predicated region
      $region21: #{patch_embed_forward.2} parent=5 // pred_check
        %p139 = pneg %p138
      $region22: #{patch_embed_forward.2} parent=5 // pred_check_branch
        %141 = sbr.rel (%p139) target = $region24
      $region23: #{patch_embed_forward.2} parent=5 // pred_region
        // Predicated region
        $region25: #{patch_embed_forward.2} parent=23 // pred_check
          %p142 = pneg %p43
        $region26: #{patch_embed_forward.2} parent=23 // pred_check_branch
          %144 = sbr.rel (%p142) target = $region28
        $region27: #{patch_embed_forward.2} parent=23 // pred_region
          %s145 = smul.u32 2, %s23
          %p146 = scmp.lt.s32.totalorder %s145, 3
          %s147 = scalar_select %p146, %s145, 3
          %s148 = smul.addr %s147, 2
          %s149 = smul.addr %s148, 4
          %s150 = scalar_lea.vmem %s2, %s149
          %s151 = smul.u32 2, %s23
        $region28: #{patch_embed_forward.2} parent=23 // pred_fallthru
          _
      $region24: #{patch_embed_forward.2} parent=5 // pred_fallthru
        _
      %p152 = scmp.le.s32.totalorder 1, %s23
      %p153 = scmp.lt.s32.totalorder %s23, 3
      %p154 = pnand %p152, %p153
      %p155 = pneg %p154
      // Predicated region
      $region29: #{patch_embed_forward.2} parent=5 // pred_check
        _
      $region30: #{patch_embed_forward.2} parent=5 // pred_check_branch
        %157 = sbr.rel (%p154) target = $region32
      $region31: #{patch_embed_forward.2} parent=5 // pred_region
        #allocation14 [shape = 'u8[8192]{0}', space=vmem, size = 0x2000, dematerialized = true, scoped, tag = 'FusionAdapter Buffer %fusion.2 = bf16[32,256]{1,0:T(8,128)(2,1)} fusion(%param_2.3, %param_1.5), kind=kLoop, calls=%fused_computation.2.clone, metadata={op_name="jit(patch_embed_forward)/jit(_pad)/pad" stack_frame_id=11}']
        #allocation15 [shape = 'u8[65536]{0}', space=vmem, size = 0x10000, dematerialized = true, scoped, tag = 'FusionAdapter Buffer %fusion.1 = bf16[256,32]{1,0:T(8,128)(2,1)} fusion(%param_0.4, %param_1.5), kind=kLoop, calls=%fused_computation.1.clone, metadata={op_name="jit(patch_embed_forward)/jit(_pad)/pad" stack_frame_id=13}']
        #allocation16 [shape = 'u8[512]{0}', space=vmem, size = 0x400, dematerialized = true, scoped, tag = 'FusionAdapter Buffer %fusion.3 = f32[1,32]{1,0:T(1,128)} fusion(%param_3.2), kind=kLoop, calls=%fused_computation.3.clone, metadata={op_name="jit(patch_embed_forward)/reshape" stack_frame_id=14}']
        %s158 = ssub.s32 %s23, 1
        %s159 = smul.u32 2, %s28
        %p160 = scmp.lt.s32.totalorder %s159, 3
        %s161 = scalar_select %p160, %s159, 3
        %s162 = smul.addr %s161, 2
        %s163 = smul.addr %s162, 4
        %s164 = scalar_lea.vmem %s2, %s163
        %p165 = pneg %p49
        %p166 = pneg %p46
        %p167 = pneg %p70
        %p168 = pneg %p67
        %p169 = pneg %p91
        %p170 = pneg %p88
        %p171 = pneg %p117
        %p172 = pneg %p114
        %s173 = sand.u32 %s104, 1
        %s174 = scalar_lea.sflag [#allocation13], %s173
        %s175 = sand.u32 %s104, 1
        %s176 = smul.addr %s175, 8
        %s177 = scalar_lea.vmem [#allocation12], %s176
        %s178 = smul.u32 2, %s28
        %p179 = scmp.lt.s32.totalorder %s178, 3
        %s180 = scalar_select %p179, %s178, 3
        %s181 = smul.addr %s180, 2
        %s182 = smul.addr %s181, 4
        %s183 = scalar_lea.vmem %s2, %s182
        %s184 = smul.u32 2, %s28
        %s185 = smul.u32 2, %s28
        %v186 = vld [vmem:[%s183] sm:$0xf]
        %v187 = vunpack.c.l.bf16 %v186
        %v188 = vunpack.c.h.bf16 %v186
        %v189 = vlaneseq
        %v190 = vand.u32 %v189, 127
        %vm192 = vcmp.lt.s32.totalorder %v190, 192
        %v193 = vsel %vm192, %v187, %v10
        %v194 = vpack.c.bf16 0.0, %v193
        %s196 = ssub.s32 16, 1
        %197 = vst [vmem:[#allocation14] sm:%s196] %v194
        %s198 = scalar_lea.vmem %s183, 4
        %s200 = sor.u32 255, 127
        %s201 = sand.u32 %s200, 85
        %s202 = sshrl.u32 %s201, 1
        %s203 = sor.u32 %s201, %s202
        %s204 = sand.u32 51, %s203
        %s205 = sshrl.u32 %s204, 2
        %s206 = sor.u32 %s204, %s205
        %s207 = sand.u32 15, %s206
        %v208 = vld [vmem:[%s198] sm:%s207]
        %v209 = vunpack.c.l.bf16 %v208
        %v210 = vunpack.c.h.bf16 %v208
        %v211 = vlaneseq
        %v212 = vand.u32 %v211, 127
        %v213 = vadd.s32 %v212, 128
        %vm214 = vcmp.lt.s32.totalorder %v213, 192
        %v215 = vsel %vm214, %v209, %v10
        %s216 = scalar_lea.vmem [#allocation14], 4
        %v217 = vpack.c.bf16 0.0, %v215
        %s219 = ssub.s32 16, 1
        %220 = vst [vmem:[%s216] sm:%s219] %v217
        %s221 = scalar_lea.vmem %s183, 8
        %v222 = vld [vmem:[%s221] sm:$0xf]
        %v223 = vunpack.c.l.bf16 %v222
        %v224 = vunpack.c.h.bf16 %v222
        %v225 = vlaneseq
        %v226 = vand.u32 %v225, 127
        %vm228 = vcmp.lt.s32.totalorder %v226, 192
        %v229 = vsel %vm228, %v223, %v10
        %s230 = scalar_lea.vmem [#allocation14], 8
        %v231 = vpack.c.bf16 0.0, %v229
        %s233 = ssub.s32 16, 1
        %234 = vst [vmem:[%s230] sm:%s233] %v231
        %s235 = scalar_lea.vmem %s183, 12
        %s237 = sor.u32 255, 127
        %s238 = sand.u32 %s237, 85
        %s239 = sshrl.u32 %s238, 1
        %s240 = sor.u32 %s238, %s239
        %s241 = sand.u32 51, %s240
        %s242 = sshrl.u32 %s241, 2
        %s243 = sor.u32 %s241, %s242
        %s244 = sand.u32 15, %s243
        %v245 = vld [vmem:[%s235] sm:%s244]
        %v246 = vunpack.c.l.bf16 %v245
        %v247 = vunpack.c.h.bf16 %v245
        %v248 = vlaneseq
        %v249 = vand.u32 %v248, 127
        %v250 = vadd.s32 %v249, 128
        %vm251 = vcmp.lt.s32.totalorder %v250, 192
        %v252 = vsel %vm251, %v246, %v10
        %s253 = scalar_lea.vmem [#allocation14], 12
        %v254 = vpack.c.bf16 0.0, %v252
        %s256 = ssub.s32 16, 1
        %257 = vst [vmem:[%s253] sm:%s256] %v254
        %v258 = vld [vmem:[%s0] sm:$0xf]
        %v259 = vunpack.c.l.bf16 %v258
        %v260 = vunpack.c.h.bf16 %v258
        %v261 = vlaneseq
        %v262 = vand.u32 %v261, 127
        %vm264 = vcmp.lt.s32.totalorder %v262, 32
        %v265 = vsel %vm264, %v259, %v15
        %v266 = vpack.c.bf16 0.0, %v265
        %s268 = ssub.s32 16, 1
        %269 = vst [vmem:[#allocation15] sm:%s268] %v266
        %s270 = scalar_lea.vmem %s0, 4
        %v271 = vld [vmem:[%s270] sm:$0xf]
        %v272 = vunpack.c.l.bf16 %v271
        %v273 = vunpack.c.h.bf16 %v271
        %v274 = vlaneseq
        %v275 = vand.u32 %v274, 127
        %vm277 = vcmp.lt.s32.totalorder %v275, 32
        %v278 = vsel %vm277, %v272, %v15
        %s279 = scalar_lea.vmem [#allocation15], 4
        %v280 = vpack.c.bf16 0.0, %v278
        %s282 = ssub.s32 16, 1
        %283 = vst [vmem:[%s279] sm:%s282] %v280
        %s284 = scalar_lea.vmem %s0, 8
        %v285 = vld [vmem:[%s284] sm:$0xf]
        %v286 = vunpack.c.l.bf16 %v285
        %v287 = vunpack.c.h.bf16 %v285
        %v288 = vlaneseq
        %v289 = vand.u32 %v288, 127
        %vm291 = vcmp.lt.s32.totalorder %v289, 32
        %v292 = vsel %vm291, %v286, %v15
        %s293 = scalar_lea.vmem [#allocation15], 8
        %v294 = vpack.c.bf16 0.0, %v292
        %s296 = ssub.s32 16, 1
        %297 = vst [vmem:[%s293] sm:%s296] %v294
        %s298 = scalar_lea.vmem %s0, 12
        %v299 = vld [vmem:[%s298] sm:$0xf]
        %v300 = vunpack.c.l.bf16 %v299
        %v301 = vunpack.c.h.bf16 %v299
        %v302 = vlaneseq
        %v303 = vand.u32 %v302, 127
        %vm305 = vcmp.lt.s32.totalorder %v303, 32
        %v306 = vsel %vm305, %v300, %v15
        %s307 = scalar_lea.vmem [#allocation15], 12
        %v308 = vpack.c.bf16 0.0, %v306
        %s310 = ssub.s32 16, 1
        %311 = vst [vmem:[%s307] sm:%s310] %v308
        %s312 = scalar_lea.vmem %s0, 16
        %v313 = vld [vmem:[%s312] sm:$0xf]
        %v314 = vunpack.c.l.bf16 %v313
        %v315 = vunpack.c.h.bf16 %v313
        %v316 = vlaneseq
        %v317 = vand.u32 %v316, 127
        %vm319 = vcmp.lt.s32.totalorder %v317, 32
        %v320 = vsel %vm319, %v314, %v15
        %s321 = scalar_lea.vmem [#allocation15], 16
        %v322 = vpack.c.bf16 0.0, %v320
        %s324 = ssub.s32 16, 1
        %325 = vst [vmem:[%s321] sm:%s324] %v322
        %s326 = scalar_lea.vmem %s0, 20
        %v327 = vld [vmem:[%s326] sm:$0xf]
        %v328 = vunpack.c.l.bf16 %v327
        %v329 = vunpack.c.h.bf16 %v327
        %v330 = vlaneseq
        %v331 = vand.u32 %v330, 127
        %vm333 = vcmp.lt.s32.totalorder %v331, 32
        %v334 = vsel %vm333, %v328, %v15
        %s335 = scalar_lea.vmem [#allocation15], 20
        %v336 = vpack.c.bf16 0.0, %v334
        %s338 = ssub.s32 16, 1
        %339 = vst [vmem:[%s335] sm:%s338] %v336
        %s340 = scalar_lea.vmem %s0, 24
        %v341 = vld [vmem:[%s340] sm:$0xf]
        %v342 = vunpack.c.l.bf16 %v341
        %v343 = vunpack.c.h.bf16 %v341
        %v344 = vlaneseq
        %v345 = vand.u32 %v344, 127
        %vm347 = vcmp.lt.s32.totalorder %v345, 32
        %v348 = vsel %vm347, %v342, %v15
        %s349 = scalar_lea.vmem [#allocation15], 24
        %v350 = vpack.c.bf16 0.0, %v348
        %s352 = ssub.s32 16, 1
        %353 = vst [vmem:[%s349] sm:%s352] %v350
        %s354 = scalar_lea.vmem %s0, 28
        %v355 = vld [vmem:[%s354] sm:$0xf]
        %v356 = vunpack.c.l.bf16 %v355
        %v357 = vunpack.c.h.bf16 %v355
        %v358 = vlaneseq
        %v359 = vand.u32 %v358, 127
        %vm361 = vcmp.lt.s32.totalorder %v359, 32
        %v362 = vsel %vm361, %v356, %v15
        %s363 = scalar_lea.vmem [#allocation15], 28
        %v364 = vpack.c.bf16 0.0, %v362
        %s366 = ssub.s32 16, 1
        %367 = vst [vmem:[%s363] sm:%s366] %v364
        %s368 = scalar_lea.vmem %s0, 32
        %v369 = vld [vmem:[%s368] sm:$0xf]
        %v370 = vunpack.c.l.bf16 %v369
        %v371 = vunpack.c.h.bf16 %v369
        %v372 = vlaneseq
        %v373 = vand.u32 %v372, 127
        %vm375 = vcmp.lt.s32.totalorder %v373, 32
        %v376 = vsel %vm375, %v370, %v15
        %s377 = scalar_lea.vmem [#allocation15], 32
        %v378 = vpack.c.bf16 0.0, %v376
        %s380 = ssub.s32 16, 1
        %381 = vst [vmem:[%s377] sm:%s380] %v378
        %s382 = scalar_lea.vmem %s0, 36
        %v383 = vld [vmem:[%s382] sm:$0xf]
        %v384 = vunpack.c.l.bf16 %v383
        %v385 = vunpack.c.h.bf16 %v383
        %v386 = vlaneseq
        %v387 = vand.u32 %v386, 127
        %vm389 = vcmp.lt.s32.totalorder %v387, 32
        %v390 = vsel %vm389, %v384, %v15
        %s391 = scalar_lea.vmem [#allocation15], 36
        %v392 = vpack.c.bf16 0.0, %v390
        %s394 = ssub.s32 16, 1
        %395 = vst [vmem:[%s391] sm:%s394] %v392
        %s396 = scalar_lea.vmem %s0, 40
        %v397 = vld [vmem:[%s396] sm:$0xf]
        %v398 = vunpack.c.l.bf16 %v397
        %v399 = vunpack.c.h.bf16 %v397
        %v400 = vlaneseq
        %v401 = vand.u32 %v400, 127
        %vm403 = vcmp.lt.s32.totalorder %v401, 32
        %v404 = vsel %vm403, %v398, %v15
        %s405 = scalar_lea.vmem [#allocation15], 40
        %v406 = vpack.c.bf16 0.0, %v404
        %s408 = ssub.s32 16, 1
        %409 = vst [vmem:[%s405] sm:%s408] %v406
        %s410 = scalar_lea.vmem %s0, 44
        %v411 = vld [vmem:[%s410] sm:$0xf]
        %v412 = vunpack.c.l.bf16 %v411
        %v413 = vunpack.c.h.bf16 %v411
        %v414 = vlaneseq
        %v415 = vand.u32 %v414, 127
        %vm417 = vcmp.lt.s32.totalorder %v415, 32
        %v418 = vsel %vm417, %v412, %v15
        %s419 = scalar_lea.vmem [#allocation15], 44
        %v420 = vpack.c.bf16 0.0, %v418
        %s422 = ssub.s32 16, 1
        %423 = vst [vmem:[%s419] sm:%s422] %v420
        %s424 = scalar_lea.vmem %s0, 48
        %v425 = vld [vmem:[%s424] sm:$0xf]
        %v426 = vunpack.c.l.bf16 %v425
        %v427 = vunpack.c.h.bf16 %v425
        %v428 = vlaneseq
        %v429 = vand.u32 %v428, 127
        %vm431 = vcmp.lt.s32.totalorder %v429, 32
        %v432 = vsel %vm431, %v426, %v15
        %s433 = scalar_lea.vmem [#allocation15], 48
        %v434 = vpack.c.bf16 0.0, %v432
        %s436 = ssub.s32 16, 1
        %437 = vst [vmem:[%s433] sm:%s436] %v434
        %s438 = scalar_lea.vmem %s0, 52
        %v439 = vld [vmem:[%s438] sm:$0xf]
        %v440 = vunpack.c.l.bf16 %v439
        %v441 = vunpack.c.h.bf16 %v439
        %v442 = vlaneseq
        %v443 = vand.u32 %v442, 127
        %vm445 = vcmp.lt.s32.totalorder %v443, 32
        %v446 = vsel %vm445, %v440, %v15
        %s447 = scalar_lea.vmem [#allocation15], 52
        %v448 = vpack.c.bf16 0.0, %v446
        %s450 = ssub.s32 16, 1
        %451 = vst [vmem:[%s447] sm:%s450] %v448
        %s452 = scalar_lea.vmem %s0, 56
        %v453 = vld [vmem:[%s452] sm:$0xf]
        %v454 = vunpack.c.l.bf16 %v453
        %v455 = vunpack.c.h.bf16 %v453
        %v456 = vlaneseq
        %v457 = vand.u32 %v456, 127
        %vm459 = vcmp.lt.s32.totalorder %v457, 32
        %v460 = vsel %vm459, %v454, %v15
        %s461 = scalar_lea.vmem [#allocation15], 56
        %v462 = vpack.c.bf16 0.0, %v460
        %s464 = ssub.s32 16, 1
        %465 = vst [vmem:[%s461] sm:%s464] %v462
        %s466 = scalar_lea.vmem %s0, 60
        %v467 = vld [vmem:[%s466] sm:$0xf]
        %v468 = vunpack.c.l.bf16 %v467
        %v469 = vunpack.c.h.bf16 %v467
        %v470 = vlaneseq
        %v471 = vand.u32 %v470, 127
        %vm473 = vcmp.lt.s32.totalorder %v471, 32
        %v474 = vsel %vm473, %v468, %v15
        %s475 = scalar_lea.vmem [#allocation15], 60
        %v476 = vpack.c.bf16 0.0, %v474
        %s478 = ssub.s32 16, 1
        %479 = vst [vmem:[%s475] sm:%s478] %v476
        %s480 = scalar_lea.vmem %s0, 64
        %s482 = sor.u32 255, 127
        %s483 = sand.u32 %s482, 85
        %s484 = sshrl.u32 %s483, 1
        %s485 = sor.u32 %s483, %s484
        %s486 = sand.u32 51, %s485
        %s487 = sshrl.u32 %s486, 2
        %s488 = sor.u32 %s486, %s487
        %s489 = sand.u32 15, %s488
        %v490 = vld [vmem:[%s480] sm:%s489]
        %v491 = vunpack.c.l.bf16 %v490
        %v492 = vunpack.c.h.bf16 %v490
        %v493 = vlaneseq
        %v494 = vand.u32 %v493, 127
        %vm496 = vcmp.lt.s32.totalorder %v494, 32
        %v497 = vsel %vm496, %v491, %v15
        %s498 = scalar_lea.vmem [#allocation15], 64
        %v499 = vpack.c.bf16 0.0, %v497
        %s501 = ssub.s32 16, 1
        %502 = vst [vmem:[%s498] sm:%s501] %v499
        %s503 = scalar_lea.vmem %s0, 68
        %s505 = sor.u32 255, 127
        %s506 = sand.u32 %s505, 85
        %s507 = sshrl.u32 %s506, 1
        %s508 = sor.u32 %s506, %s507
        %s509 = sand.u32 51, %s508
        %s510 = sshrl.u32 %s509, 2
        %s511 = sor.u32 %s509, %s510
        %s512 = sand.u32 15, %s511
        %v513 = vld [vmem:[%s503] sm:%s512]
        %v514 = vunpack.c.l.bf16 %v513
        %v515 = vunpack.c.h.bf16 %v513
        %v516 = vlaneseq
        %v517 = vand.u32 %v516, 127
        %vm519 = vcmp.lt.s32.totalorder %v517, 32
        %v520 = vsel %vm519, %v514, %v15
        %s521 = scalar_lea.vmem [#allocation15], 68
        %v522 = vpack.c.bf16 0.0, %v520
        %s524 = ssub.s32 16, 1
        %525 = vst [vmem:[%s521] sm:%s524] %v522
        %s526 = scalar_lea.vmem %s0, 72
        %s528 = sor.u32 255, 127
        %s529 = sand.u32 %s528, 85
        %s530 = sshrl.u32 %s529, 1
        %s531 = sor.u32 %s529, %s530
        %s532 = sand.u32 51, %s531
        %s533 = sshrl.u32 %s532, 2
        %s534 = sor.u32 %s532, %s533
        %s535 = sand.u32 15, %s534
        %v536 = vld [vmem:[%s526] sm:%s535]
        %v537 = vunpack.c.l.bf16 %v536
        %v538 = vunpack.c.h.bf16 %v536
        %v539 = vlaneseq
        %v540 = vand.u32 %v539, 127
        %vm542 = vcmp.lt.s32.totalorder %v540, 32
        %v543 = vsel %vm542, %v537, %v15
        %s544 = scalar_lea.vmem [#allocation15], 72
        %v545 = vpack.c.bf16 0.0, %v543
        %s547 = ssub.s32 16, 1
        %548 = vst [vmem:[%s544] sm:%s547] %v545
        %s549 = scalar_lea.vmem %s0, 76
        %s551 = sor.u32 255, 127
        %s552 = sand.u32 %s551, 85
        %s553 = sshrl.u32 %s552, 1
        %s554 = sor.u32 %s552, %s553
        %s555 = sand.u32 51, %s554
        %s556 = sshrl.u32 %s555, 2
        %s557 = sor.u32 %s555, %s556
        %s558 = sand.u32 15, %s557
        %v559 = vld [vmem:[%s549] sm:%s558]
        %v560 = vunpack.c.l.bf16 %v559
        %v561 = vunpack.c.h.bf16 %v559
        %v562 = vlaneseq
        %v563 = vand.u32 %v562, 127
        %vm565 = vcmp.lt.s32.totalorder %v563, 32
        %v566 = vsel %vm565, %v560, %v15
        %s567 = scalar_lea.vmem [#allocation15], 76
        %v568 = vpack.c.bf16 0.0, %v566
        %s570 = ssub.s32 16, 1
        %571 = vst [vmem:[%s567] sm:%s570] %v568
        %s572 = scalar_lea.vmem %s0, 80
        %s574 = sor.u32 255, 127
        %s575 = sand.u32 %s574, 85
        %s576 = sshrl.u32 %s575, 1
        %s577 = sor.u32 %s575, %s576
        %s578 = sand.u32 51, %s577
        %s579 = sshrl.u32 %s578, 2
        %s580 = sor.u32 %s578, %s579
        %s581 = sand.u32 15, %s580
        %v582 = vld [vmem:[%s572] sm:%s581]
        %v583 = vunpack.c.l.bf16 %v582
        %v584 = vunpack.c.h.bf16 %v582
        %v585 = vlaneseq
        %v586 = vand.u32 %v585, 127
        %vm588 = vcmp.lt.s32.totalorder %v586, 32
        %v589 = vsel %vm588, %v583, %v15
        %s590 = scalar_lea.vmem [#allocation15], 80
        %v591 = vpack.c.bf16 0.0, %v589
        %s593 = ssub.s32 16, 1
        %594 = vst [vmem:[%s590] sm:%s593] %v591
        %s595 = scalar_lea.vmem %s0, 84
        %s597 = sor.u32 255, 127
        %s598 = sand.u32 %s597, 85
        %s599 = sshrl.u32 %s598, 1
        %s600 = sor.u32 %s598, %s599
        %s601 = sand.u32 51, %s600
        %s602 = sshrl.u32 %s601, 2
        %s603 = sor.u32 %s601, %s602
        %s604 = sand.u32 15, %s603
        %v605 = vld [vmem:[%s595] sm:%s604]
        %v606 = vunpack.c.l.bf16 %v605
        %v607 = vunpack.c.h.bf16 %v605
        %v608 = vlaneseq
        %v609 = vand.u32 %v608, 127
        %vm611 = vcmp.lt.s32.totalorder %v609, 32
        %v612 = vsel %vm611, %v606, %v15
        %s613 = scalar_lea.vmem [#allocation15], 84
        %v614 = vpack.c.bf16 0.0, %v612
        %s616 = ssub.s32 16, 1
        %617 = vst [vmem:[%s613] sm:%s616] %v614
        %s618 = scalar_lea.vmem %s0, 88
        %s620 = sor.u32 255, 127
        %s621 = sand.u32 %s620, 85
        %s622 = sshrl.u32 %s621, 1
        %s623 = sor.u32 %s621, %s622
        %s624 = sand.u32 51, %s623
        %s625 = sshrl.u32 %s624, 2
        %s626 = sor.u32 %s624, %s625
        %s627 = sand.u32 15, %s626
        %v628 = vld [vmem:[%s618] sm:%s627]
        %v629 = vunpack.c.l.bf16 %v628
        %v630 = vunpack.c.h.bf16 %v628
        %v631 = vlaneseq
        %v632 = vand.u32 %v631, 127
        %vm634 = vcmp.lt.s32.totalorder %v632, 32
        %v635 = vsel %vm634, %v629, %v15
        %s636 = scalar_lea.vmem [#allocation15], 88
        %v637 = vpack.c.bf16 0.0, %v635
        %s639 = ssub.s32 16, 1
        %640 = vst [vmem:[%s636] sm:%s639] %v637
        %s641 = scalar_lea.vmem %s0, 92
        %s643 = sor.u32 255, 127
        %s644 = sand.u32 %s643, 85
        %s645 = sshrl.u32 %s644, 1
        %s646 = sor.u32 %s644, %s645
        %s647 = sand.u32 51, %s646
        %s648 = sshrl.u32 %s647, 2
        %s649 = sor.u32 %s647, %s648
        %s650 = sand.u32 15, %s649
        %v651 = vld [vmem:[%s641] sm:%s650]
        %v652 = vunpack.c.l.bf16 %v651
        %v653 = vunpack.c.h.bf16 %v651
        %v654 = vlaneseq
        %v655 = vand.u32 %v654, 127
        %vm657 = vcmp.lt.s32.totalorder %v655, 32
        %v658 = vsel %vm657, %v652, %v15
        %s659 = scalar_lea.vmem [#allocation15], 92
        %v660 = vpack.c.bf16 0.0, %v658
        %s662 = ssub.s32 16, 1
        %663 = vst [vmem:[%s659] sm:%s662] %v660
        %s664 = scalar_lea.vmem [#allocation15], 96
        %v665 = vpack.c.bf16 0.0, %v15
        %s667 = ssub.s32 16, 1
        %668 = vst [vmem:[%s664] sm:%s667] %v665
        %s669 = scalar_lea.vmem [#allocation15], 100
        %v670 = vpack.c.bf16 0.0, %v15
        %s672 = ssub.s32 16, 1
        %673 = vst [vmem:[%s669] sm:%s672] %v670
        %s674 = scalar_lea.vmem [#allocation15], 104
        %v675 = vpack.c.bf16 0.0, %v15
        %s677 = ssub.s32 16, 1
        %678 = vst [vmem:[%s674] sm:%s677] %v675
        %s679 = scalar_lea.vmem [#allocation15], 108
        %v680 = vpack.c.bf16 0.0, %v15
        %s682 = ssub.s32 16, 1
        %683 = vst [vmem:[%s679] sm:%s682] %v680
        %s684 = scalar_lea.vmem [#allocation15], 112
        %v685 = vpack.c.bf16 0.0, %v15
        %s687 = ssub.s32 16, 1
        %688 = vst [vmem:[%s684] sm:%s687] %v685
        %s689 = scalar_lea.vmem [#allocation15], 116
        %v690 = vpack.c.bf16 0.0, %v15
        %s692 = ssub.s32 16, 1
        %693 = vst [vmem:[%s689] sm:%s692] %v690
        %s694 = scalar_lea.vmem [#allocation15], 120
        %v695 = vpack.c.bf16 0.0, %v15
        %s697 = ssub.s32 16, 1
        %698 = vst [vmem:[%s694] sm:%s697] %v695
        %s699 = scalar_lea.vmem [#allocation15], 124
        %v700 = vpack.c.bf16 0.0, %v15
        %s702 = ssub.s32 16, 1
        %703 = vst [vmem:[%s699] sm:%s702] %v700
        %v704 = vld [vmem:[%s3] sm:$0x1]
        %s706 = ssub.s32 2, 1
        %707 = vst [vmem:[#allocation16] sm:%s706] %v704
        %v708 = vld [vmem:[#allocation14] sm:$0xff]
        %v709 = vld [vmem:[#allocation14 + $0x8] sm:$0xff]
        %v710 = vld [vmem:[#allocation15] sm:$0xf]
        %v711 = vld [vmem:[#allocation15 + $0x4] sm:$0xf]
        %v712 = vld [vmem:[#allocation15 + $0x8] sm:$0xf]
        %v713 = vld [vmem:[#allocation15 + $0xc] sm:$0xf]
        %v714 = vld [vmem:[#allocation15 + $0x10] sm:$0xf]
        %v715 = vld [vmem:[#allocation15 + $0x14] sm:$0xf]
        %v716 = vld [vmem:[#allocation15 + $0x18] sm:$0xf]
        %v717 = vld [vmem:[#allocation15 + $0x1c] sm:$0xf]
        %v718 = vld [vmem:[#allocation15 + $0x20] sm:$0xf]
        %v719 = vld [vmem:[#allocation15 + $0x24] sm:$0xf]
        %v720 = vld [vmem:[#allocation15 + $0x28] sm:$0xf]
        %v721 = vld [vmem:[#allocation15 + $0x2c] sm:$0xf]
        %v722 = vld [vmem:[#allocation15 + $0x30] sm:$0xf]
        %v723 = vld [vmem:[#allocation15 + $0x34] sm:$0xf]
        %v724 = vld [vmem:[#allocation15 + $0x38] sm:$0xf]
        %v725 = vld [vmem:[#allocation15 + $0x3c] sm:$0xf]
        %v726 = vld [vmem:[#allocation15 + $0x40] sm:$0xf]
        %v727 = vld [vmem:[#allocation15 + $0x44] sm:$0xf]
        %v728 = vld [vmem:[#allocation15 + $0x48] sm:$0xf]
        %v729 = vld [vmem:[#allocation15 + $0x4c] sm:$0xf]
        %v730 = vld [vmem:[#allocation15 + $0x50] sm:$0xf]
        %v731 = vld [vmem:[#allocation15 + $0x54] sm:$0xf]
        %v732 = vld [vmem:[#allocation15 + $0x58] sm:$0xf]
        %v733 = vld [vmem:[#allocation15 + $0x5c] sm:$0xf]
        %v734 = vld [vmem:[#allocation15 + $0x60] sm:$0xf]
        %v735 = vld [vmem:[#allocation15 + $0x64] sm:$0xf]
        %v736 = vld [vmem:[#allocation15 + $0x68] sm:$0xf]
        %v737 = vld [vmem:[#allocation15 + $0x6c] sm:$0xf]
        %v738 = vld [vmem:[#allocation15 + $0x70] sm:$0xf]
        %v739 = vld [vmem:[#allocation15 + $0x74] sm:$0xf]
        %v740 = vld [vmem:[#allocation15 + $0x78] sm:$0xf]
        %v741 = vld [vmem:[#allocation15 + $0x7c] sm:$0xf]
        %v742 = vld [vmem:[#allocation16] sm:$0x1]
        %v744 = vperm.slane %v742, 0
        %v748 = vunpack.c.l.b16 %v708
        %v749 = vunpack.c.h.b16 %v708
        %v750 = vunpack.c.l.b16 %v709
        %v751 = vunpack.c.h.b16 %v709
        %v752 = vpack.c.b16 %v750, %v748
        %v753 = vpack.c.b16 %v751, %v749
        %v788 = vunpack.c.l.b16 %v710
        %v789 = vunpack.c.l.b16 %v711
        %v790 = vunpack.c.l.b16 %v712
        %v791 = vunpack.c.l.b16 %v713
        %v792 = vunpack.c.l.b16 %v714
        %v793 = vunpack.c.l.b16 %v715
        %v794 = vunpack.c.l.b16 %v716
        %v795 = vunpack.c.l.b16 %v717
        %v796 = vunpack.c.l.b16 %v718
        %v797 = vunpack.c.l.b16 %v719
        %v798 = vunpack.c.l.b16 %v720
        %v799 = vunpack.c.l.b16 %v721
        %v800 = vunpack.c.l.b16 %v722
        %v801 = vunpack.c.l.b16 %v723
        %v802 = vunpack.c.l.b16 %v724
        %v803 = vunpack.c.l.b16 %v725
        %v804 = vunpack.c.l.b16 %v726
        %v805 = vunpack.c.l.b16 %v727
        %v806 = vunpack.c.l.b16 %v728
        %v807 = vunpack.c.l.b16 %v729
        %v808 = vunpack.c.l.b16 %v730
        %v809 = vunpack.c.l.b16 %v731
        %v810 = vunpack.c.l.b16 %v732
        %v811 = vunpack.c.l.b16 %v733
        %v812 = vunpack.c.l.b16 %v734
        %v813 = vunpack.c.l.b16 %v735
        %v814 = vunpack.c.l.b16 %v736
        %v815 = vunpack.c.l.b16 %v737
        %v816 = vunpack.c.l.b16 %v738
        %v817 = vunpack.c.l.b16 %v739
        %v818 = vunpack.c.l.b16 %v740
        %v819 = vunpack.c.l.b16 %v741
        %v820 = vpack.c.b16 %v789, %v788
        %v821 = vpack.c.b16 %v791, %v790
        %v822 = vpack.c.b16 %v793, %v792
        %v823 = vpack.c.b16 %v795, %v794
        %v824 = vpack.c.b16 %v797, %v796
        %v825 = vpack.c.b16 %v799, %v798
        %v826 = vpack.c.b16 %v801, %v800
        %v827 = vpack.c.b16 %v803, %v802
        %v828 = vpack.c.b16 %v805, %v804
        %v829 = vpack.c.b16 %v807, %v806
        %v830 = vpack.c.b16 %v809, %v808
        %v831 = vpack.c.b16 %v811, %v810
        %v832 = vpack.c.b16 %v813, %v812
        %v833 = vpack.c.b16 %v815, %v814
        %v834 = vpack.c.b16 %v817, %v816
        %v835 = vpack.c.b16 %v819, %v818
        %852 = vmatpush.bf16.msra.mxu0 %v827
        %853 = vmatpush.bf16.msra.mxu0 %v826
        %854 = vmatpush.bf16.msra.mxu0 %v825
        %855 = vmatpush.bf16.msra.mxu0 %v824
        %856 = vmatpush.bf16.msra.mxu0 %v823
        %857 = vmatpush.bf16.msra.mxu0 %v822
        %858 = vmatpush.bf16.msra.mxu0 %v821
        %859 = vmatpush.bf16.msra.mxu0 %v820
        %860 = vmatmul.bf16.gmra.mxu0 %v752
        %v861 = vpop.f32.mrf.mxu0
        %v862 = vadd.f32 %v744, %v861
        %v863 = vpop.f32.mrf.mxu0
        %v864 = vadd.f32 %v744, %v863
        %865 = vdwg.mxu0
        %866 = vmatpush.bf16.msra.mxu0 %v835
        %867 = vmatpush.bf16.msra.mxu0 %v834
        %868 = vmatpush.bf16.msra.mxu0 %v833
        %869 = vmatpush.bf16.msra.mxu0 %v832
        %870 = vmatpush.bf16.msra.mxu0 %v831
        %871 = vmatpush.bf16.msra.mxu0 %v830
        %872 = vmatpush.bf16.msra.mxu0 %v829
        %873 = vmatpush.bf16.msra.mxu0 %v828
        %874 = vmatmul.bf16.gmra.mxu0 %v753
        %v875 = vpop.f32.mrf.mxu0
        %v876 = vadd.f32 %v862, %v875
        %v877 = vpop.f32.mrf.mxu0
        %v878 = vadd.f32 %v864, %v877
        %879 = vdwg.mxu0
        %v880 = vpack.c.bf16 %v876, %v876
        %v881 = vpack.c.bf16 %v878, %v878
        %vm882 = vcmask 257024
        %883 = vst.msk [vmem:[%s177] sm:$0xf] %vm882, %v880
        %884 = vst.msk [vmem:[%s177 + $0x4] sm:$0xf] %vm882, %v881
        %s885 = sand.u32 %s104, 1
        %s886 = scalar_lea.sflag [#allocation13], %s885
        %s887 = sand.u32 %s104, 1
        %s888 = smul.addr %s887, 8
        %s889 = scalar_lea.vmem [#allocation12], %s888
        // Predicated region
        $region33: #{patch_embed_forward.2} parent=31 // pred_check
          %p890 = pneg %p114
        $region34: #{patch_embed_forward.2} parent=31 // pred_check_branch
          %892 = sbr.rel (%p890) target = $region36
        $region35: #{patch_embed_forward.2} parent=31 // pred_region
          %s893 = smul.u32 2, %s28
          %895 = vsyncadd %s886, 0
          %s896 = smul.addr %s893, 4
          %s897 = scalar_lea.hbm %s4, %s896
          %s898 = sshll.u32 %s889, 4
          %s899 = int_to_ptr.vmem [resolvable:$true] %s898
          %s900 = sshll.u32 %s897, 4
          %s901 = int_to_ptr.hbm [resolvable:$true] %s900
          %906 = dma.vmem_to_hbm [thread:$0]  %s899, 128, %s901, %s886, 64, 64, 4
        $region36: #{patch_embed_forward.2} parent=31 // pred_fallthru
          _
      $region32: #{patch_embed_forward.2} parent=5 // pred_fallthru
        _
      %p907 = scmp.le.s32.totalorder 2, %s23
      // Predicated region
      $region37: #{patch_embed_forward.2} parent=5 // pred_check
        %p908 = pneg %p907
      $region38: #{patch_embed_forward.2} parent=5 // pred_check_branch
        %910 = sbr.rel (%p908) target = $region40
      $region39: #{patch_embed_forward.2} parent=5 // pred_region
        %s911 = ssub.s32 %s23, 2
        // Predicated region
        $region41: #{patch_embed_forward.2} parent=39 // pred_check
          %p912 = pneg %p120
        $region42: #{patch_embed_forward.2} parent=39 // pred_check_branch
          %914 = sbr.rel (%p912) target = $region44
        $region43: #{patch_embed_forward.2} parent=39 // pred_region
          %s915 = sand.u32 %s105, 1
          %s916 = scalar_lea.sflag [#allocation13], %s915
          %s917 = sand.u32 %s105, 1
          %s918 = smul.addr %s917, 8
          %s919 = scalar_lea.vmem [#allocation12], %s918
          %921 = dma.done %s916, 128
        $region44: #{patch_embed_forward.2} parent=39 // pred_fallthru
          _
      $region40: #{patch_embed_forward.2} parent=5 // pred_fallthru
        _
    $region6: #{patch_embed_forward.2} parent=1 // loop_footer
      %s27 = sadd.s32 1, %s23
    $region7: #{patch_embed_forward.2} parent=1 // loop_footer_branch
      %22 = sbr.rel target = $region3
    $region8: #{patch_embed_forward.2} parent=1 // loop_exit
      _
    %922 = vsyncpa [#allocation13], 1
    %s923 = scalar_lea.sflag [#allocation13], 1
    %924 = vsyncpa %s923, 1

</llo_original>
